<compile_context>
chip_gen: v6e
topology: v6e:2x2x1
jax: 0.10.0
libtpu: 0.0.40
codegen_flags: <defaults>
</compile_context>

<pallas_src>
import jax
import jax.numpy as jnp
from jax.experimental import pallas as pl
from jax.experimental.pallas import tpu as pltpu


def qnetwork_kernel(s_ref, a_ref, w1s_ref, w1a_ref, b1_ref,
                    w2_ref, b2_ref, w3_ref, b3_ref, o_ref):
    # Fused concat: x @ W1 == state @ W1[:n_obs] + action @ W1[n_obs:]
    s = s_ref[...].astype(jnp.bfloat16)
    a = a_ref[...].astype(jnp.bfloat16)
    h1 = (jnp.dot(s, w1s_ref[...], preferred_element_type=jnp.float32)
          + jnp.dot(a, w1a_ref[...], preferred_element_type=jnp.float32)
          + b1_ref[...])
    h1 = jnp.maximum(h1, 0.0)                               # f32 ReLU (VPU)

    h2 = jnp.dot(h1.astype(jnp.bfloat16), w2_ref[...],
                 preferred_element_type=jnp.float32) + b2_ref[...]
    h2 = jnp.maximum(h2, 0.0)                               # f32 ReLU (VPU)

    # Final 256 -> 1 projection: VPU multiply + lane reduction instead of a
    # degenerate N=1 MXU matmul.  w3_ref is (1, 256), broadcast over rows.
    out = jnp.sum(h2 * w3_ref[...], axis=-1, keepdims=True) + b3_ref[...]
    o_ref[...] = out.astype(o_ref.dtype)


def prepare_params(params, n_obs):
    """Convert f32 (in,out) params to the kernel layout:
       W1 split at n_obs and cast to bf16, W2 bf16, W3 as a (1,256) f32 row."""
    w1, b1, w2, b2, w3, b3 = params
    return (w1[:n_obs].astype(jnp.bfloat16),          # (n_obs, 256)
            w1[n_obs:].astype(jnp.bfloat16),           # (n_act, 256)
            b1.astype(jnp.float32),                    # (1, 256)
            w2.astype(jnp.bfloat16),                   # (256, 256)
            b2.astype(jnp.float32),                    # (1, 256)
            jnp.reshape(w3, (1, -1)).astype(jnp.float32),  # (1, 256)
            b3.astype(jnp.float32))                    # (1, 1)


def qnetwork_forward(state, action, kparams, *, max_batch_tile=256):
    """state: (B, n_obs), action: (B, n_act).  Returns (B, 1) f32 Q-values."""
    w1s, w1a, b1, w2, b2, w3, b3 = kparams
    B, n_obs = state.shape
    n_act = action.shape[1]

    # Batch tile: multiple of 8 (sublane), capped at max_batch_tile.
    tb = min(max_batch_tile, ((B + 7) // 8) * 8)
    b_pad = ((B + tb - 1) // tb) * tb
    if b_pad != B:
        pad = b_pad - B
        state = jnp.pad(state, ((0, pad), (0, 0)))
        action = jnp.pad(action, ((0, pad), (0, 0)))

    batch_map = lambda i: (i, 0)
    const_map = lambda i: (0, 0)

    out = pl.pallas_call(
        qnetwork_kernel,
        out_shape=jax.ShapeDtypeStruct((b_pad, 1), jnp.float32),
        grid_spec=pltpu.PrefetchScalarGridSpec(
            num_scalar_prefetch=0,
            grid=(b_pad // tb,),
            in_specs=[
                pl.BlockSpec((tb, n_obs), batch_map),   # state  (batch-tiled)
                pl.BlockSpec((tb, n_act), batch_map),   # action (batch-tiled)
                pl.BlockSpec(w1s.shape, const_map),     # resident weights
                pl.BlockSpec(w1a.shape, const_map),
                pl.BlockSpec(b1.shape, const_map),
                pl.BlockSpec(w2.shape, const_map),
                pl.BlockSpec(b2.shape, const_map),
                pl.BlockSpec(w3.shape, const_map),
                pl.BlockSpec(b3.shape, const_map),
            ],
            out_specs=pl.BlockSpec((tb, 1), batch_map),
        ),
        compiler_params=pltpu.CompilerParams(
            dimension_semantics=("parallel",)),          # 2-TC split on v7x
    )(state.astype(jnp.float32), action.astype(jnp.float32),
      w1s, w1a, b1, w2, b2, w3, b3)
    return out[:B]


def init_params(key, n_obs, n_act, hidden=256):
    """Deterministic init mimicking torch.nn.Linear default
       (U[-1/sqrt(fan_in), 1/sqrt(fan_in)]), stored (in, out), f32."""
    d_in = n_obs + n_act
    ks = jax.random.split(key, 6)

    def unif(k, shape, fan_in):
        bound = 1.0 / jnp.sqrt(jnp.float32(fan_in))
        return jax.random.uniform(k, shape, jnp.float32, -bound, bound)

    w1 = unif(ks[0], (d_in, hidden), d_in)
    b1 = unif(ks[1], (1, hidden), d_in)
    w2 = unif(ks[2], (hidden, hidden), hidden)
    b2 = unif(ks[3], (1, hidden), hidden)
    w3 = unif(ks[4], (hidden, 1), hidden)
    b3 = unif(ks[5], (1, 1), hidden)
    return (w1, b1, w2, b2, w3, b3)


def qnetwork_reference_f32(state, action, params):
    w1, b1, w2, b2, w3, b3 = params
    x = jnp.concatenate([state, action], axis=1).astype(jnp.float32)
    h1 = jnp.maximum(x @ w1 + b1, 0.0)
    h2 = jnp.maximum(h1 @ w2 + b2, 0.0)
    return h2 @ w3 + b3


def qnetwork_reference_bf16(state, action, params):
    """Reference matching the kernel's bf16-matmul / f32-accumulate numerics."""
    w1, b1, w2, b2, w3, b3 = params
    x = jnp.concatenate([state, action], axis=1)
    h1 = jnp.maximum(
        jnp.dot(x.astype(jnp.bfloat16), w1.astype(jnp.bfloat16),
                preferred_element_type=jnp.float32) + b1, 0.0)
    h2 = jnp.maximum(
        jnp.dot(h1.astype(jnp.bfloat16), w2.astype(jnp.bfloat16),
                preferred_element_type=jnp.float32) + b2, 0.0)
    return h2 @ w3 + b3


if __name__ == "__main__":
    key = jax.random.PRNGKey(0)
    k_params, k_state, k_action = jax.random.split(key, 3)

    batch = 8
    n_obs = 17   # e.g. a MuJoCo-style observation vector
    n_act = 6    # e.g. a MuJoCo-style action vector

    params = init_params(k_params, n_obs, n_act, hidden=256)
    kparams = prepare_params(params, n_obs)
    state = jax.random.normal(k_state, (batch, n_obs), jnp.float32)
    action = jax.random.normal(k_action, (batch, n_act), jnp.float32)

    q = qnetwork_forward(state, action, kparams)
    q = jax.block_until_ready(q)

    q_ref_bf16 = qnetwork_reference_bf16(state, action, params)
    q_ref_f32 = qnetwork_reference_f32(state, action, params)

    assert q.shape == (batch, 1), q.shape
    assert jnp.allclose(q, q_ref_bf16, atol=2e-3, rtol=2e-3), \
        "mismatch vs bf16-matched reference"
    assert jnp.allclose(q, q_ref_f32, atol=5e-2, rtol=5e-2), \
        "mismatch vs f32 reference"

    print("KERNEL_OK")
</pallas_src>

<mosaic_0001>
module attributes {stable_mosaic.version = 11 : i64} {
  func.func @qnetwork_kernel(%arg0: i32, %arg1: memref<8x17xf32, #tpu.memory_space<vmem>>, %arg2: memref<8x6xf32, #tpu.memory_space<vmem>>, %arg3: memref<17x256xbf16, #tpu.memory_space<vmem>>, %arg4: memref<6x256xbf16, #tpu.memory_space<vmem>>, %arg5: memref<1x256xf32, #tpu.memory_space<vmem>>, %arg6: memref<256x256xbf16, #tpu.memory_space<vmem>>, %arg7: memref<1x256xf32, #tpu.memory_space<vmem>>, %arg8: memref<1x256xf32, #tpu.memory_space<vmem>>, %arg9: memref<1x1xf32, #tpu.memory_space<vmem>>, %arg10: memref<8x1xf32, #tpu.memory_space<vmem>>) attributes {dimension_semantics = [#tpu.dimension_semantics<parallel>], iteration_bounds = array<i64: 1>, scalar_prefetch = 0 : i64, scratch_operands = 0 : i64, tpu.core_type = #tpu.core_type<tc>, window_params = [{transform_indices = @transform_0, window_bounds = array<i64: 8, 17>}, {transform_indices = @transform_1, window_bounds = array<i64: 8, 6>}, {pipeline_mode = #tpu.pipeline_mode<synchronous>, transform_indices = @transform_2, window_bounds = array<i64: 17, 256>}, {pipeline_mode = #tpu.pipeline_mode<synchronous>, transform_indices = @transform_3, window_bounds = array<i64: 6, 256>}, {pipeline_mode = #tpu.pipeline_mode<synchronous>, transform_indices = @transform_4, window_bounds = array<i64: 1, 256>}, {pipeline_mode = #tpu.pipeline_mode<synchronous>, transform_indices = @transform_5, window_bounds = array<i64: 256, 256>}, {pipeline_mode = #tpu.pipeline_mode<synchronous>, transform_indices = @transform_6, window_bounds = array<i64: 1, 256>}, {pipeline_mode = #tpu.pipeline_mode<synchronous>, transform_indices = @transform_7, window_bounds = array<i64: 1, 256>}, {pipeline_mode = #tpu.pipeline_mode<synchronous>, transform_indices = @transform_8, window_bounds = array<i64: 1, 1>}, {transform_indices = @transform_9, window_bounds = array<i64: 8, 1>}]} {
    %c0 = arith.constant 0 : index
    %c0_0 = arith.constant 0 : index
    %0 = vector.load %arg1[%c0, %c0_0] : memref<8x17xf32, #tpu.memory_space<vmem>>, vector<8x17xf32>
    %1 = arith.truncf %0 : vector<8x17xf32> to vector<8x17xbf16>
    %c0_1 = arith.constant 0 : index
    %c0_2 = arith.constant 0 : index
    %2 = vector.load %arg2[%c0_1, %c0_2] : memref<8x6xf32, #tpu.memory_space<vmem>>, vector<8x6xf32>
    %3 = arith.truncf %2 : vector<8x6xf32> to vector<8x6xbf16>
    %c0_3 = arith.constant 0 : index
    %c0_4 = arith.constant 0 : index
    %4 = vector.load %arg3[%c0_3, %c0_4] : memref<17x256xbf16, #tpu.memory_space<vmem>>, vector<17x256xbf16>
    %cst = arith.constant dense<0.000000e+00> : vector<8x256xf32>
    %5 = tpu.matmul %1, %4, %cst {dimension_numbers = #tpu.dot_dimension_numbers<[1], [0], [0], [1], [0, 0, 1, 1], [], []>} : vector<8x17xbf16>, vector<17x256xbf16>, vector<8x256xf32> -> vector<8x256xf32>
    %c0_5 = arith.constant 0 : index
    %c0_6 = arith.constant 0 : index
    %6 = vector.load %arg4[%c0_5, %c0_6] : memref<6x256xbf16, #tpu.memory_space<vmem>>, vector<6x256xbf16>
    %cst_7 = arith.constant dense<0.000000e+00> : vector<8x256xf32>
    %7 = tpu.matmul %3, %6, %cst_7 {dimension_numbers = #tpu.dot_dimension_numbers<[1], [0], [0], [1], [0, 0, 1, 1], [], []>} : vector<8x6xbf16>, vector<6x256xbf16>, vector<8x256xf32> -> vector<8x256xf32>
    %8 = arith.addf %5, %7 : vector<8x256xf32>
    %c0_8 = arith.constant 0 : index
    %c0_9 = arith.constant 0 : index
    %9 = vector.load %arg5[%c0_8, %c0_9] : memref<1x256xf32, #tpu.memory_space<vmem>>, vector<1x256xf32>
    %10 = vector.broadcast %9 : vector<1x256xf32> to vector<8x256xf32>
    %11 = arith.addf %8, %10 : vector<8x256xf32>
    %cst_10 = arith.constant 0.000000e+00 : f32
    %12 = vector.broadcast %cst_10 : f32 to vector<8x256xf32>
    %13 = arith.maximumf %11, %12 : vector<8x256xf32>
    %14 = arith.truncf %13 : vector<8x256xf32> to vector<8x256xbf16>
    %c0_11 = arith.constant 0 : index
    %c0_12 = arith.constant 0 : index
    %15 = vector.load %arg6[%c0_11, %c0_12] : memref<256x256xbf16, #tpu.memory_space<vmem>>, vector<256x256xbf16>
    %cst_13 = arith.constant dense<0.000000e+00> : vector<8x256xf32>
    %16 = tpu.matmul %14, %15, %cst_13 {dimension_numbers = #tpu.dot_dimension_numbers<[1], [0], [0], [1], [0, 0, 1, 1], [], []>} : vector<8x256xbf16>, vector<256x256xbf16>, vector<8x256xf32> -> vector<8x256xf32>
    %c0_14 = arith.constant 0 : index
    %c0_15 = arith.constant 0 : index
    %17 = vector.load %arg7[%c0_14, %c0_15] : memref<1x256xf32, #tpu.memory_space<vmem>>, vector<1x256xf32>
    %18 = vector.broadcast %17 : vector<1x256xf32> to vector<8x256xf32>
    %19 = arith.addf %16, %18 : vector<8x256xf32>
    %cst_16 = arith.constant 0.000000e+00 : f32
    %20 = vector.broadcast %cst_16 : f32 to vector<8x256xf32>
    %21 = arith.maximumf %19, %20 : vector<8x256xf32>
    %c0_17 = arith.constant 0 : index
    %c0_18 = arith.constant 0 : index
    %22 = vector.load %arg8[%c0_17, %c0_18] : memref<1x256xf32, #tpu.memory_space<vmem>>, vector<1x256xf32>
    %23 = vector.broadcast %22 : vector<1x256xf32> to vector<8x256xf32>
    %24 = arith.mulf %21, %23 : vector<8x256xf32>
    %cst_19 = arith.constant dense<0.000000e+00> : vector<8xf32>
    %25 = vector.multi_reduction <add>, %24, %cst_19 [1] : vector<8x256xf32> to vector<8xf32>
    %26 = vector.shape_cast %25 : vector<8xf32> to vector<8x1xf32>
    %c0_20 = arith.constant 0 : index
    %c0_21 = arith.constant 0 : index
    %27 = vector.load %arg9[%c0_20, %c0_21] : memref<1x1xf32, #tpu.memory_space<vmem>>, vector<1x1xf32>
    %28 = vector.broadcast %27 : vector<1x1xf32> to vector<8x1xf32>
    %29 = arith.addf %26, %28 : vector<8x1xf32>
    %c0_22 = arith.constant 0 : index
    %c0_23 = arith.constant 0 : index
    %30 = vector.load %arg10[%c0_22, %c0_23] : memref<8x1xf32, #tpu.memory_space<vmem>>, vector<8x1xf32>
    tpu.vector_store %arg10[%c0_22, %c0_23], %29 {strides = array<i32>} : memref<8x1xf32, #tpu.memory_space<vmem>>, vector<8x1xf32>,
    return
  }
  func.func @transform_0(%arg0: i32) -> (i32, i32) {
    %c0_i32 = arith.constant 0 : i32
    %c0_i32_0 = arith.constant 0 : i32
    return %arg0, %c0_i32 : i32, i32
  }
  func.func @transform_1(%arg0: i32) -> (i32, i32) {
    %c0_i32 = arith.constant 0 : i32
    %c0_i32_0 = arith.constant 0 : i32
    return %arg0, %c0_i32 : i32, i32
  }
  func.func @transform_2(%arg0: i32) -> (i32, i32) {
    %c0_i32 = arith.constant 0 : i32
    %c0_i32_0 = arith.constant 0 : i32
    %c0_i32_1 = arith.constant 0 : i32
    return %c0_i32, %c0_i32_0 : i32, i32
  }
  func.func @transform_3(%arg0: i32) -> (i32, i32) {
    %c0_i32 = arith.constant 0 : i32
    %c0_i32_0 = arith.constant 0 : i32
    %c0_i32_1 = arith.constant 0 : i32
    return %c0_i32, %c0_i32_0 : i32, i32
  }
  func.func @transform_4(%arg0: i32) -> (i32, i32) {
    %c0_i32 = arith.constant 0 : i32
    %c0_i32_0 = arith.constant 0 : i32
    %c0_i32_1 = arith.constant 0 : i32
    return %c0_i32, %c0_i32_0 : i32, i32
  }
  func.func @transform_5(%arg0: i32) -> (i32, i32) {
    %c0_i32 = arith.constant 0 : i32
    %c0_i32_0 = arith.constant 0 : i32
    %c0_i32_1 = arith.constant 0 : i32
    return %c0_i32, %c0_i32_0 : i32, i32
  }
  func.func @transform_6(%arg0: i32) -> (i32, i32) {
    %c0_i32 = arith.constant 0 : i32
    %c0_i32_0 = arith.constant 0 : i32
    %c0_i32_1 = arith.constant 0 : i32
    return %c0_i32, %c0_i32_0 : i32, i32
  }
  func.func @transform_7(%arg0: i32) -> (i32, i32) {
    %c0_i32 = arith.constant 0 : i32
    %c0_i32_0 = arith.constant 0 : i32
    %c0_i32_1 = arith.constant 0 : i32
    return %c0_i32, %c0_i32_0 : i32, i32
  }
  func.func @transform_8(%arg0: i32) -> (i32, i32) {
    %c0_i32 = arith.constant 0 : i32
    %c0_i32_0 = arith.constant 0 : i32
    %c0_i32_1 = arith.constant 0 : i32
    return %c0_i32, %c0_i32_0 : i32, i32
  }
  func.func @transform_9(%arg0: i32) -> (i32, i32) {
    %c0_i32 = arith.constant 0 : i32
    %c0_i32_0 = arith.constant 0 : i32
    return %arg0, %c0_i32 : i32, i32
  }
}

</mosaic_0001>

<llo_original>
// kernel: tpu_custom_call.1
$region0: #{tpu_custom_call.1}
  #allocation0 [shape = 'u32[]', space=smem, size = 0x4, offset = 0x4, fixed_abs, tag = 'smem constant byte address 0x4 - core index']
  #allocation1 [shape = 'u32[144,128]{1,0:T(1,128)}', space=vmem, size = 0x12000, scoped, tag = 'internal scratch']
  #allocation2 [shape = 'f32[1,1]{1,0:T(1,128)S(1)}', space=vmem, size = 0x200, scoped, tag = 'scoped memory for tpu_custom_call.1']
  %s0 = inlined_call_operand.hbm [shape: f32[8,17], index: 0, kind: input, shape index: {}]
  %s1 = inlined_call_operand.hbm [shape: f32[8,6], index: 1, kind: input, shape index: {}]
  %s2 = inlined_call_operand.hbm [shape: bf16[17,256], index: 2, kind: input, shape index: {}]
  %s3 = inlined_call_operand.hbm [shape: bf16[6,256], index: 3, kind: input, shape index: {}]
  %s4 = inlined_call_operand.vmem [shape: f32[1,256], index: 4, kind: input, shape index: {}]
  %s5 = inlined_call_operand.hbm [shape: bf16[256,256], index: 5, kind: input, shape index: {}]
  %s6 = inlined_call_operand.vmem [shape: f32[1,256], index: 6, kind: input, shape index: {}]
  %s7 = inlined_call_operand.vmem [shape: f32[1,256], index: 7, kind: input, shape index: {}]
  %s8 = inlined_call_operand.<no memory space> [shape: f32[1,1], index: 8, kind: input, shape index: {}]
  %s9 = inlined_call_operand.vmem [shape: f32[8,1], index: 9, kind: output, shape index: {}]
  %s10 = sld [smem:[#allocation0]]
  $region66: #{tpu_custom_call.1} parent=0
    _
  %s12 = ssub.s32 1, %s10
  %s13 = scalar_select 0, %s12, %s10
  %v14 = vstv %s8
  %15 = vst [vmem:[#allocation2] sm:$0x1] %v14
  $region1: #{tpu_custom_call.1} parent=0
    #allocation3 [shape = 'u8[4096]{0}', space=vmem, size = 0x1000, scoped, tag = 'input window, operand 0, single buffered']
    #allocation4 [shape = 's32[1]{0}', space=sflag, size = 0x4, scoped, tag = 'scoped memory for tpu_custom_call.1']
    #allocation5 [shape = 'u8[4096]{0}', space=vmem, size = 0x1000, scoped, tag = 'input window, operand 1, single buffered']
    #allocation6 [shape = 's32[1]{0}', space=sflag, size = 0x4, scoped, tag = 'scoped memory for tpu_custom_call.1']
    #allocation7 [shape = 'u8[12288]{0}', space=vmem, size = 0x3000, scoped, tag = 'input window, operand 2, single buffered']
    #allocation8 [shape = 'u8[4096]{0}', space=vmem, size = 0x1000, scoped, tag = 'input window, operand 3, single buffered']
    #allocation9 [shape = 's32[1]{0}', space=sflag, size = 0x4, scoped, tag = 'scoped memory for tpu_custom_call.1']
    #allocation10 [shape = 'u8[131072]{0}', space=vmem, size = 0x20000, scoped, tag = 'input window, operand 5, single buffered']
    %16 = vsyncpa [#allocation4], 0
    %17 = vsyncpa [#allocation6], 0
    %18 = vsyncpa [#allocation9], 0
    // Predicated region
    $region2: #{tpu_custom_call.1} parent=1 // pred_check
      _
    $region3: #{tpu_custom_call.1} parent=1 // pred_check_branch
      %20 = sbr.rel (0) target = $region5
    $region4: #{tpu_custom_call.1} parent=1 // pred_region
      %s22 = ssub.s32 128, 128
      %23 = vsyncadd [#allocation4], %s22
      %s25 = sshll.u32 [#allocation3], 4
      %s26 = int_to_ptr.vmem [resolvable:$true] %s25
      %28 = dma.hbm_to_vmem [thread:$0]  %s0, 128, %s26, [#allocation4]
    $region5: #{tpu_custom_call.1} parent=1 // pred_fallthru
      _
    // Predicated region
    $region6: #{tpu_custom_call.1} parent=1 // pred_check
      _
    $region7: #{tpu_custom_call.1} parent=1 // pred_check_branch
      %30 = sbr.rel (0) target = $region9
    $region8: #{tpu_custom_call.1} parent=1 // pred_region
      %s32 = ssub.s32 128, 128
      %33 = vsyncadd [#allocation6], %s32
      %s35 = sshll.u32 [#allocation5], 4
      %s36 = int_to_ptr.vmem [resolvable:$true] %s35
      %38 = dma.hbm_to_vmem [thread:$0]  %s1, 128, %s36, [#allocation6]
    $region9: #{tpu_custom_call.1} parent=1 // pred_fallthru
      _
    // Predicated region
    $region10: #{tpu_custom_call.1} parent=1 // pred_check
      _
    $region11: #{tpu_custom_call.1} parent=1 // pred_check_branch
      %40 = sbr.rel (0) target = $region13
    $region12: #{tpu_custom_call.1} parent=1 // pred_region
      %s42 = ssub.s32 384, 384
      %43 = vsyncadd [#allocation6], %s42
      %s44 = sshll.u32 [#allocation7], 4
      %s45 = int_to_ptr.vmem [resolvable:$true] %s44
      %50 = dma.hbm_to_vmem [thread:$0]  %s2, 384, %s45, [#allocation6], 128, 128, 8
    $region13: #{tpu_custom_call.1} parent=1 // pred_fallthru
      _
    // Predicated region
    $region14: #{tpu_custom_call.1} parent=1 // pred_check
      _
    $region15: #{tpu_custom_call.1} parent=1 // pred_check_branch
      %52 = sbr.rel (0) target = $region17
    $region16: #{tpu_custom_call.1} parent=1 // pred_region
      %s54 = ssub.s32 128, 128
      %55 = vsyncadd [#allocation9], %s54
      %s57 = sshll.u32 [#allocation8], 4
      %s58 = int_to_ptr.vmem [resolvable:$true] %s57
      %60 = dma.hbm_to_vmem [thread:$0]  %s3, 128, %s58, [#allocation9]
    $region17: #{tpu_custom_call.1} parent=1 // pred_fallthru
      _
    // Predicated region
    $region18: #{tpu_custom_call.1} parent=1 // pred_check
      _
    $region19: #{tpu_custom_call.1} parent=1 // pred_check_branch
      %62 = sbr.rel (0) target = $region21
    $region20: #{tpu_custom_call.1} parent=1 // pred_region
      _
    $region21: #{tpu_custom_call.1} parent=1 // pred_fallthru
      _
    // Predicated region
    $region22: #{tpu_custom_call.1} parent=1 // pred_check
      _
    $region23: #{tpu_custom_call.1} parent=1 // pred_check_branch
      %64 = sbr.rel (0) target = $region25
    $region24: #{tpu_custom_call.1} parent=1 // pred_region
      %s66 = ssub.s32 4096, 4096
      %67 = vsyncadd [#allocation9], %s66
      %s68 = sshll.u32 [#allocation10], 4
      %s69 = int_to_ptr.vmem [resolvable:$true] %s68
      %74 = dma.hbm_to_vmem [thread:$0]  %s5, 4096, %s69, [#allocation9], 128, 128, 8
    $region25: #{tpu_custom_call.1} parent=1 // pred_fallthru
      _
    // Predicated region
    $region26: #{tpu_custom_call.1} parent=1 // pred_check
      _
    $region27: #{tpu_custom_call.1} parent=1 // pred_check_branch
      %76 = sbr.rel (0) target = $region29
    $region28: #{tpu_custom_call.1} parent=1 // pred_region
      _
    $region29: #{tpu_custom_call.1} parent=1 // pred_fallthru
      _
    // Predicated region
    $region30: #{tpu_custom_call.1} parent=1 // pred_check
      _
    $region31: #{tpu_custom_call.1} parent=1 // pred_check_branch
      %78 = sbr.rel (0) target = $region33
    $region32: #{tpu_custom_call.1} parent=1 // pred_region
      _
    $region33: #{tpu_custom_call.1} parent=1 // pred_fallthru
      _
    // Predicated region
    $region34: #{tpu_custom_call.1} parent=1 // pred_check
      _
    $region35: #{tpu_custom_call.1} parent=1 // pred_check_branch
      %80 = sbr.rel (0) target = $region37
    $region36: #{tpu_custom_call.1} parent=1 // pred_region
      _
    $region37: #{tpu_custom_call.1} parent=1 // pred_fallthru
      _
    // Predicated region
    $region38: #{tpu_custom_call.1} parent=1 // pred_check
      _
    $region39: #{tpu_custom_call.1} parent=1 // pred_check_branch
      %82 = sbr.rel (0) target = $region41
    $region40: #{tpu_custom_call.1} parent=1 // pred_region
      %83 = dma.done [#allocation4], 128
    $region41: #{tpu_custom_call.1} parent=1 // pred_fallthru
      _
    // Predicated region
    $region42: #{tpu_custom_call.1} parent=1 // pred_check
      _
    $region43: #{tpu_custom_call.1} parent=1 // pred_check_branch
      %85 = sbr.rel (0) target = $region45
    $region44: #{tpu_custom_call.1} parent=1 // pred_region
      %86 = dma.done [#allocation6], 128
    $region45: #{tpu_custom_call.1} parent=1 // pred_fallthru
      _
    // Predicated region
    $region46: #{tpu_custom_call.1} parent=1 // pred_check
      _
    $region47: #{tpu_custom_call.1} parent=1 // pred_check_branch
      %88 = sbr.rel (0) target = $region49
    $region48: #{tpu_custom_call.1} parent=1 // pred_region
      %89 = dma.done [#allocation6], 384
    $region49: #{tpu_custom_call.1} parent=1 // pred_fallthru
      _
    // Predicated region
    $region50: #{tpu_custom_call.1} parent=1 // pred_check
      _
    $region51: #{tpu_custom_call.1} parent=1 // pred_check_branch
      %91 = sbr.rel (0) target = $region53
    $region52: #{tpu_custom_call.1} parent=1 // pred_region
      %92 = dma.done [#allocation9], 128
    $region53: #{tpu_custom_call.1} parent=1 // pred_fallthru
      _
    // Predicated region
    $region54: #{tpu_custom_call.1} parent=1 // pred_check
      _
    $region55: #{tpu_custom_call.1} parent=1 // pred_check_branch
      %94 = sbr.rel (0) target = $region57
    $region56: #{tpu_custom_call.1} parent=1 // pred_region
      %95 = dma.done [#allocation9], 4096
    $region57: #{tpu_custom_call.1} parent=1 // pred_fallthru
      _
    %v97 = vld [vmem:[#allocation3] sm:$0xff]
    %v98 = vpack.c.bf16 %v97, %v97
    %v99 = vld [vmem:[#allocation5] sm:$0xff]
    %v100 = vpack.c.bf16 %v99, %v99
    %v101 = vld [vmem:[#allocation7] sm:$0xff]
    %v102 = vld [vmem:[#allocation7 + $0x8] sm:$0xff]
    %v103 = vld [vmem:[#allocation7 + $0x10] sm:$0x11]
    %v104 = vld [vmem:[#allocation8] sm:$0x77]
    %v106 = vunpack.c.l.b16 %v104
    %v107 = vunpack.c.h.b16 %v104
    %v108 = vpack.c.b16 %v106, %v106
    %v109 = vpack.c.b16 %v107, %v107
    %vm110 = vcmask 48128
    %v112 = vsel %vm110, %v100, 0
    %vm114 = vcmask 1042432
    %v116 = vsel %vm114, %v108, 0
    %v119 = vsel %vm114, %v109, 0
    %121 = vmatprep.subr.bf16.mxu0 0
    %122 = vmatpush1.bf16.msra.mxu0 0
    %123 = vmatprep.subr.bf16.mxu0 0
    %124 = vmatpush1.bf16.msra.mxu0 0
    %125 = vmatprep.subr.bf16.mxu0 0
    %126 = vmatpush1.bf16.msra.mxu0 0
    %127 = vmatprep.subr.bf16.mxu0 0
    %128 = vmatpush1.bf16.msra.mxu0 0
    %129 = vmatprep.subr.bf16.mxu0 0
    %130 = vmatpush1.bf16.msra.mxu0 0
    %131 = vmatprep.subr.bf16.mxu0 0
    %132 = vmatpush1.bf16.msra.mxu0 0
    %133 = vmatprep.subr.bf16.mxu0 0
    %134 = vmatpush1.bf16.msra.mxu0 0
    %135 = vmatprep.subr.bf16.mxu0 %v119
    %136 = vmatpush1.bf16.msra.mxu0 %v116
    %137 = vmatprep.subr.bf16.mxu0 0
    %138 = vmatpush2.bf16.msra.mxu0 0
    %139 = vmatprep.subr.bf16.mxu0 0
    %140 = vmatpush2.bf16.msra.mxu0 0
    %141 = vmatprep.subr.bf16.mxu0 0
    %142 = vmatpush2.bf16.msra.mxu0 0
    %143 = vmatprep.subr.bf16.mxu0 0
    %144 = vmatpush2.bf16.msra.mxu0 0
    %145 = vmatprep.subr.bf16.mxu0 0
    %146 = vmatpush2.bf16.msra.mxu0 0
    %147 = vmatprep.subr.bf16.mxu0 0
    %148 = vmatpush2.bf16.msra.mxu0 0
    %149 = vmatprep.subr.bf16.mxu0 0
    %150 = vmatpush2.bf16.msra.mxu0 0
    %151 = vmatprep.subr.bf16.mxu0 0
    %152 = vmatpush2.bf16.msra.mxu0 0
    %153 = vmatprep.mubr.bf16.mxu0 0
    %154 = vmatmul.mubr.bf16.gmra.mxu0 %v112
    %v155 = vpop.f32.mrf.mxu0
    %v156 = vadd.f32 0.0, %v155
    %v157 = vpop.f32.mrf.mxu0
    %v158 = vadd.f32 0.0, %v157
    %v159 = vpop.f32.mrf.mxu0
    %v160 = vpop.f32.mrf.mxu0
    %161 = vdwg.mxu0
    %v165 = vunpack.c.l.b16 %v101
    %v166 = vunpack.c.h.b16 %v101
    %v167 = vunpack.c.l.b16 %v102
    %v168 = vunpack.c.h.b16 %v102
    %v169 = vunpack.c.l.b16 %v103
    %v170 = vunpack.c.h.b16 %v103
    %v171 = vpack.c.b16 %v167, %v165
    %v172 = vpack.c.b16 %v168, %v166
    %v173 = vpack.c.b16 %v169, %v169
    %v174 = vpack.c.b16 %v170, %v170
    %vm177 = vcmask 138240
    %v179 = vsel %vm177, %v98, 0
    %vm181 = vcmask 1040384
    %v182 = vsel 0, 4294967295, 65535
    %v183 = vsel %vm181, %v182, 0
    %v185 = vand.u32 %v173, %v183
    %v188 = vand.u32 %v174, %v183
    %190 = vmatprep.subr.bf16.mxu0 0
    %191 = vmatpush1.bf16.msra.mxu0 0
    %192 = vmatprep.subr.bf16.mxu0 0
    %193 = vmatpush1.bf16.msra.mxu0 0
    %194 = vmatprep.subr.bf16.mxu0 0
    %195 = vmatpush1.bf16.msra.mxu0 0
    %196 = vmatprep.subr.bf16.mxu0 0
    %197 = vmatpush1.bf16.msra.mxu0 0
    %198 = vmatprep.subr.bf16.mxu0 0
    %199 = vmatpush1.bf16.msra.mxu0 0
    %200 = vmatprep.subr.bf16.mxu0 0
    %201 = vmatpush1.bf16.msra.mxu0 0
    %202 = vmatprep.subr.bf16.mxu0 %v188
    %203 = vmatpush1.bf16.msra.mxu0 %v185
    %204 = vmatprep.subr.bf16.mxu0 %v172
    %205 = vmatpush1.bf16.msra.mxu0 %v171
    %206 = vmatprep.subr.bf16.mxu0 0
    %207 = vmatpush2.bf16.msra.mxu0 0
    %208 = vmatprep.subr.bf16.mxu0 0
    %209 = vmatpush2.bf16.msra.mxu0 0
    %210 = vmatprep.subr.bf16.mxu0 0
    %211 = vmatpush2.bf16.msra.mxu0 0
    %212 = vmatprep.subr.bf16.mxu0 0
    %213 = vmatpush2.bf16.msra.mxu0 0
    %214 = vmatprep.subr.bf16.mxu0 0
    %215 = vmatpush2.bf16.msra.mxu0 0
    %216 = vmatprep.subr.bf16.mxu0 0
    %217 = vmatpush2.bf16.msra.mxu0 0
    %218 = vmatprep.subr.bf16.mxu0 0
    %219 = vmatpush2.bf16.msra.mxu0 0
    %220 = vmatprep.subr.bf16.mxu0 0
    %221 = vmatpush2.bf16.msra.mxu0 0
    %222 = vmatprep.mubr.bf16.mxu0 0
    %223 = vmatmul.mubr.bf16.gmra.mxu0 %v179
    %v224 = vpop.f32.mrf.mxu0
    %v225 = vadd.f32 %v156, %v224
    %v226 = vpop.f32.mrf.mxu0
    %v227 = vadd.f32 %v158, %v226
    %v228 = vpop.f32.mrf.mxu0
    %v229 = vpop.f32.mrf.mxu0
    %230 = vdwg.mxu0
    %v231 = vld [vmem:[%s4] sm:$0x3]
    %v233 = vlaneseq
    %v234 = vshrl.u32 %v233, 7
    %v235 = vsub.s32 0, %v234
    %v236 = vrot.slane %v231, %v235
    %v237 = vlaneseq
    %v238 = vshrl.u32 %v237, 7
    %v239 = vsub.s32 1, %v238
    %v240 = vrot.slane %v231, %v239
    %v243 = vadd.f32 %v225, %v236
    %v244 = vadd.f32 %v227, %v240
    %v245 = vmax.f32 %v243, 0.0
    %v246 = vmax.f32 %v244, 0.0
    %v247 = vpack.c.bf16 %v245, %v245
    %v248 = vpack.c.bf16 %v246, %v246
    %v249 = vld [vmem:[#allocation10] sm:$0xff]
    %v250 = vld [vmem:[#allocation10 + $0x8] sm:$0xff]
    %v251 = vld [vmem:[#allocation10 + $0x10] sm:$0xff]
    %v252 = vld [vmem:[#allocation10 + $0x18] sm:$0xff]
    %v253 = vld [vmem:[#allocation10 + $0x20] sm:$0xff]
    %v254 = vld [vmem:[#allocation10 + $0x28] sm:$0xff]
    %v255 = vld [vmem:[#allocation10 + $0x30] sm:$0xff]
    %v256 = vld [vmem:[#allocation10 + $0x38] sm:$0xff]
    %v257 = vld [vmem:[#allocation10 + $0x40] sm:$0xff]
    %v258 = vld [vmem:[#allocation10 + $0x48] sm:$0xff]
    %v259 = vld [vmem:[#allocation10 + $0x50] sm:$0xff]
    %v260 = vld [vmem:[#allocation10 + $0x58] sm:$0xff]
    %v261 = vld [vmem:[#allocation10 + $0x60] sm:$0xff]
    %v262 = vld [vmem:[#allocation10 + $0x68] sm:$0xff]
    %v263 = vld [vmem:[#allocation10 + $0x70] sm:$0xff]
    %v264 = vld [vmem:[#allocation10 + $0x78] sm:$0xff]
    %v265 = vld [vmem:[#allocation10 + $0x80] sm:$0xff]
    %v266 = vld [vmem:[#allocation10 + $0x88] sm:$0xff]
    %v267 = vld [vmem:[#allocation10 + $0x90] sm:$0xff]
    %v268 = vld [vmem:[#allocation10 + $0x98] sm:$0xff]
    %v269 = vld [vmem:[#allocation10 + $0xa0] sm:$0xff]
    %v270 = vld [vmem:[#allocation10 + $0xa8] sm:$0xff]
    %v271 = vld [vmem:[#allocation10 + $0xb0] sm:$0xff]
    %v272 = vld [vmem:[#allocation10 + $0xb8] sm:$0xff]
    %v273 = vld [vmem:[#allocation10 + $0xc0] sm:$0xff]
    %v274 = vld [vmem:[#allocation10 + $0xc8] sm:$0xff]
    %v275 = vld [vmem:[#allocation10 + $0xd0] sm:$0xff]
    %v276 = vld [vmem:[#allocation10 + $0xd8] sm:$0xff]
    %v277 = vld [vmem:[#allocation10 + $0xe0] sm:$0xff]
    %v278 = vld [vmem:[#allocation10 + $0xe8] sm:$0xff]
    %v279 = vld [vmem:[#allocation10 + $0xf0] sm:$0xff]
    %v280 = vld [vmem:[#allocation10 + $0xf8] sm:$0xff]
    %v281 = vld [vmem:[%s6] sm:$0x3]
    %v283 = vlaneseq
    %v284 = vshrl.u32 %v283, 7
    %v285 = vsub.s32 0, %v284
    %v286 = vrot.slane %v281, %v285
    %v287 = vlaneseq
    %v288 = vshrl.u32 %v287, 7
    %v289 = vsub.s32 1, %v288
    %v290 = vrot.slane %v281, %v289
    %v325 = vunpack.c.l.b16 %v249
    %v326 = vunpack.c.h.b16 %v249
    %v327 = vunpack.c.l.b16 %v250
    %v328 = vunpack.c.h.b16 %v250
    %v329 = vunpack.c.l.b16 %v251
    %v330 = vunpack.c.h.b16 %v251
    %v331 = vunpack.c.l.b16 %v252
    %v332 = vunpack.c.h.b16 %v252
    %v333 = vunpack.c.l.b16 %v253
    %v334 = vunpack.c.h.b16 %v253
    %v335 = vunpack.c.l.b16 %v254
    %v336 = vunpack.c.h.b16 %v254
    %v337 = vunpack.c.l.b16 %v255
    %v338 = vunpack.c.h.b16 %v255
    %v339 = vunpack.c.l.b16 %v256
    %v340 = vunpack.c.h.b16 %v256
    %v341 = vunpack.c.l.b16 %v257
    %v342 = vunpack.c.h.b16 %v257
    %v343 = vunpack.c.l.b16 %v258
    %v344 = vunpack.c.h.b16 %v258
    %v345 = vunpack.c.l.b16 %v259
    %v346 = vunpack.c.h.b16 %v259
    %v347 = vunpack.c.l.b16 %v260
    %v348 = vunpack.c.h.b16 %v260
    %v349 = vunpack.c.l.b16 %v261
    %v350 = vunpack.c.h.b16 %v261
    %v351 = vunpack.c.l.b16 %v262
    %v352 = vunpack.c.h.b16 %v262
    %v353 = vunpack.c.l.b16 %v263
    %v354 = vunpack.c.h.b16 %v263
    %v355 = vunpack.c.l.b16 %v264
    %v356 = vunpack.c.h.b16 %v264
    %v357 = vunpack.c.l.b16 %v265
    %v358 = vunpack.c.h.b16 %v265
    %v359 = vunpack.c.l.b16 %v266
    %v360 = vunpack.c.h.b16 %v266
    %v361 = vunpack.c.l.b16 %v267
    %v362 = vunpack.c.h.b16 %v267
    %v363 = vunpack.c.l.b16 %v268
    %v364 = vunpack.c.h.b16 %v268
    %v365 = vunpack.c.l.b16 %v269
    %v366 = vunpack.c.h.b16 %v269
    %v367 = vunpack.c.l.b16 %v270
    %v368 = vunpack.c.h.b16 %v270
    %v369 = vunpack.c.l.b16 %v271
    %v370 = vunpack.c.h.b16 %v271
    %v371 = vunpack.c.l.b16 %v272
    %v372 = vunpack.c.h.b16 %v272
    %v373 = vunpack.c.l.b16 %v273
    %v374 = vunpack.c.h.b16 %v273
    %v375 = vunpack.c.l.b16 %v274
    %v376 = vunpack.c.h.b16 %v274
    %v377 = vunpack.c.l.b16 %v275
    %v378 = vunpack.c.h.b16 %v275
    %v379 = vunpack.c.l.b16 %v276
    %v380 = vunpack.c.h.b16 %v276
    %v381 = vunpack.c.l.b16 %v277
    %v382 = vunpack.c.h.b16 %v277
    %v383 = vunpack.c.l.b16 %v278
    %v384 = vunpack.c.h.b16 %v278
    %v385 = vunpack.c.l.b16 %v279
    %v386 = vunpack.c.h.b16 %v279
    %v387 = vunpack.c.l.b16 %v280
    %v388 = vunpack.c.h.b16 %v280
    %v389 = vpack.c.b16 %v327, %v325
    %v390 = vpack.c.b16 %v328, %v326
    %v391 = vpack.c.b16 %v331, %v329
    %v392 = vpack.c.b16 %v332, %v330
    %v393 = vpack.c.b16 %v335, %v333
    %v394 = vpack.c.b16 %v336, %v334
    %v395 = vpack.c.b16 %v339, %v337
    %v396 = vpack.c.b16 %v340, %v338
    %v397 = vpack.c.b16 %v343, %v341
    %v398 = vpack.c.b16 %v344, %v342
    %v399 = vpack.c.b16 %v347, %v345
    %v400 = vpack.c.b16 %v348, %v346
    %v401 = vpack.c.b16 %v351, %v349
    %v402 = vpack.c.b16 %v352, %v350
    %v403 = vpack.c.b16 %v355, %v353
    %v404 = vpack.c.b16 %v356, %v354
    %v405 = vpack.c.b16 %v359, %v357
    %v406 = vpack.c.b16 %v360, %v358
    %v407 = vpack.c.b16 %v363, %v361
    %v408 = vpack.c.b16 %v364, %v362
    %v409 = vpack.c.b16 %v367, %v365
    %v410 = vpack.c.b16 %v368, %v366
    %v411 = vpack.c.b16 %v371, %v369
    %v412 = vpack.c.b16 %v372, %v370
    %v413 = vpack.c.b16 %v375, %v373
    %v414 = vpack.c.b16 %v376, %v374
    %v415 = vpack.c.b16 %v379, %v377
    %v416 = vpack.c.b16 %v380, %v378
    %v417 = vpack.c.b16 %v383, %v381
    %v418 = vpack.c.b16 %v384, %v382
    %v419 = vpack.c.b16 %v387, %v385
    %v420 = vpack.c.b16 %v388, %v386
    %453 = vmatprep.subr.bf16.mxu0 %v404
    %454 = vmatpush1.bf16.msra.mxu0 %v403
    %455 = vmatprep.subr.bf16.mxu0 %v402
    %456 = vmatpush1.bf16.msra.mxu0 %v401
    %457 = vmatprep.subr.bf16.mxu0 %v400
    %458 = vmatpush1.bf16.msra.mxu0 %v399
    %459 = vmatprep.subr.bf16.mxu0 %v398
    %460 = vmatpush1.bf16.msra.mxu0 %v397
    %461 = vmatprep.subr.bf16.mxu0 %v396
    %462 = vmatpush1.bf16.msra.mxu0 %v395
    %463 = vmatprep.subr.bf16.mxu0 %v394
    %464 = vmatpush1.bf16.msra.mxu0 %v393
    %465 = vmatprep.subr.bf16.mxu0 %v392
    %466 = vmatpush1.bf16.msra.mxu0 %v391
    %467 = vmatprep.subr.bf16.mxu0 %v390
    %468 = vmatpush1.bf16.msra.mxu0 %v389
    %469 = vmatprep.subr.bf16.mxu0 %v420
    %470 = vmatpush2.bf16.msra.mxu0 %v419
    %471 = vmatprep.subr.bf16.mxu0 %v418
    %472 = vmatpush2.bf16.msra.mxu0 %v417
    %473 = vmatprep.subr.bf16.mxu0 %v416
    %474 = vmatpush2.bf16.msra.mxu0 %v415
    %475 = vmatprep.subr.bf16.mxu0 %v414
    %476 = vmatpush2.bf16.msra.mxu0 %v413
    %477 = vmatprep.subr.bf16.mxu0 %v412
    %478 = vmatpush2.bf16.msra.mxu0 %v411
    %479 = vmatprep.subr.bf16.mxu0 %v410
    %480 = vmatpush2.bf16.msra.mxu0 %v409
    %481 = vmatprep.subr.bf16.mxu0 %v408
    %482 = vmatpush2.bf16.msra.mxu0 %v407
    %483 = vmatprep.subr.bf16.mxu0 %v406
    %484 = vmatpush2.bf16.msra.mxu0 %v405
    %485 = vmatprep.mubr.bf16.mxu0 %v248
    %486 = vmatmul.mubr.bf16.gmra.mxu0 %v247
    %v487 = vpop.f32.mrf.mxu0
    %v488 = vadd.f32 %v286, %v487
    %v489 = vpop.f32.mrf.mxu0
    %v490 = vadd.f32 %v290, %v489
    %v491 = vpop.f32.mrf.mxu0
    %v492 = vpop.f32.mrf.mxu0
    %493 = vdwg.mxu0
    %v494 = vmax.f32 %v488, 0.0
    %v495 = vmax.f32 %v490, 0.0
    %v496 = vld [vmem:[%s7] sm:$0x3]
    %v498 = vlaneseq
    %v499 = vshrl.u32 %v498, 7
    %v500 = vsub.s32 0, %v499
    %v501 = vrot.slane %v496, %v500
    %v502 = vlaneseq
    %v503 = vshrl.u32 %v502, 7
    %v504 = vsub.s32 1, %v503
    %v505 = vrot.slane %v496, %v504
    %v508 = vmul.f32 %v494, %v501
    %v509 = vmul.f32 %v495, %v505
    %v510 = vadd.f32 %v508, %v509
    %511 = vadd.xlane.f32.xlu0 %v510
    %v512 = vpop.xlane.xlu0 %511
    %v513 = vld [vmem:[#allocation2] sm:$0x1]
    %v515 = vlaneseq
    %v516 = vshrl.u32 %v515, 7
    %v517 = vsub.s32 0, %v516
    %v518 = vrot.slane %v513, %v517
    %v520 = vadd.f32 %v512, %v518
    %vm521 = vcmask 7168
    %522 = vst.msk [vmem:[%s9] sm:$0xff] %vm521, %v520
    // Predicated region
    $region58: #{tpu_custom_call.1} parent=1 // pred_check
      _
    $region59: #{tpu_custom_call.1} parent=1 // pred_check_branch
      %524 = sbr.rel (0) target = $region61
    $region60: #{tpu_custom_call.1} parent=1 // pred_region
      _
    $region61: #{tpu_custom_call.1} parent=1 // pred_fallthru
      _
    // Predicated region
    $region62: #{tpu_custom_call.1} parent=1 // pred_check
      _
    $region63: #{tpu_custom_call.1} parent=1 // pred_check_branch
      %526 = sbr.rel (0) target = $region65
    $region64: #{tpu_custom_call.1} parent=1 // pred_region
      _
    $region65: #{tpu_custom_call.1} parent=1 // pred_fallthru
      _
    %527 = vsyncpa [#allocation4], 1
    %528 = vsyncpa [#allocation6], 1
    %529 = vsyncpa [#allocation9], 1

</llo_original>
